<compile_context>
chip_gen: v6e
topology: v6e:2x2x1
jax: 0.10.0
libtpu: 0.0.40
codegen_flags: <defaults>
</compile_context>

<pallas_src>
import functools

import jax
import jax.numpy as jnp
from jax.experimental import pallas as pl
from jax.experimental.pallas import tpu as pltpu


_MAX_TILE_ROWS = 1024            # >=512-row tiles are already ~roofline
_F32_TEMP_BYTES_PER_ELEM = 24    # ~6 live full-tile f32 temporaries in the body


@functools.lru_cache(maxsize=None)
def _tpu_params():
    """(vmem_limit_bytes, working_set_budget_bytes, n_tensorcores), generation aware."""
    mib = 1024 * 1024
    vmem_cap = None
    n_tc = None
    try:
        info = pltpu.get_tpu_info()
        cap = getattr(info, "vmem_capacity_bytes", None)
        if cap:
            vmem_cap = int(cap)
        for attr in ("num_tensorcores", "tensorcores_per_chip", "num_cores"):
            val = getattr(info, attr, None)
            if isinstance(val, int) and val > 0:
                n_tc = val
                break
    except Exception:
        pass
    kind = ""
    try:
        kind = jax.devices()[0].device_kind.lower()
    except Exception:
        pass
    is_v7 = "v7" in kind
    if n_tc is None:
        n_tc = 2 if is_v7 else 1
    n_tc = max(1, min(2, n_tc))
    if (not is_v7) and vmem_cap is not None and vmem_cap >= 100 * mib:
        # v5e / v6e: 128 MiB physical VMEM, single TensorCore.
        return 64 * mib, 52 * mib, n_tc
    # v7x-class (64 MiB per TC) or unknown hardware: stay conservative.
    return 48 * mib, 40 * mib, n_tc


def _cwd_group_kernel(s_ref, t_ref, w_ref, out_ref, acc_ref, *,
                      tau, rows_valid, inner, needs_mask):
    """One (tr, L) row tile of the student/teacher matrices.

    Grid = (core_split, row_tiles_per_split); the row-tile (reduction) axis is
    last.  Softmax / log-softmax run along the lane (last) axis; the per-step
    reduction is VPU adds into an (8, L) accumulator, the single cross-lane
    reduce happens once in the epilogue.
    """
    i = pl.program_id(1)

    @pl.when(i == 0)
    def _init():
        acc_ref[...] = jnp.zeros_like(acc_ref)

    tr, L = s_ref.shape
    s = s_ref[...].astype(jnp.float32)
    t = t_ref[...].astype(jnp.float32)
    w = w_ref[...].astype(jnp.float32)            # (tr, 1) per-row 1/(C*N)

    if needs_mask:
        # Nominal (unclamped) first global row of this tile.  Rows >= rows_valid
        # (ragged last tile / duplicated clamped tile) are garbage and must be
        # zeroed BEFORE the exp/log chain; zero rows contribute exactly 0.
        row0 = (pl.program_id(0) * inner + i) * tr
        rid = jax.lax.broadcasted_iota(jnp.int32, (tr, 1), 0)
        valid = (row0 + rid) < rows_valid
        s = jnp.where(valid, s, 0.0)
        t = jnp.where(valid, t, 0.0)
        w = jnp.where(valid, w, 0.0)               # garbage weight * 0 -> NaN otherwise

    if tau != 1.0:                                 # trace-time: skip when tau == 1
        inv_tau = 1.0 / float(tau)
        s = s * inv_tau
        t = t * inv_tau

    # Teacher softmax (reusing exp(t_shift)) and both log-softmax denominators.
    t_max = jnp.max(t, axis=-1, keepdims=True)
    t_shift = t - t_max
    e_t = jnp.exp(t_shift)
    denom_t = jnp.sum(e_t, axis=-1, keepdims=True)

    s_max = jnp.max(s, axis=-1, keepdims=True)
    s_shift = s - s_max
    denom_s = jnp.sum(jnp.exp(s_shift), axis=-1, keepdims=True)

    # log_p_t - log_p_s = (t_shift - s_shift) - row_const, with the two per-row
    # log terms folded into a single (tr, 1) constant.  The per-row weight
    # 1/(C*N) rides along inside the softmax reciprocal -> no extra full-tile op.
    row_const = jnp.log(denom_t) - jnp.log(denom_s)            # (tr, 1)
    scale = w * pl.reciprocal(denom_t)                          # (tr, 1)
    contrib = (e_t * scale) * ((t_shift - s_shift) - row_const)  # (tr, L)

    # Fold row-groups of 8 into the (8, L) accumulator: pure VPU adds, no
    # per-step cross-lane (XLU) work.
    acc_ref[...] += jnp.sum(contrib.reshape(tr // 8, 8, L), axis=0)

    @pl.when(i == pl.num_programs(1) - 1)
    def _fini():
        total = jnp.sum(acc_ref[...])                           # single XLU reduce
        out_ref[...] = jnp.broadcast_to(total, out_ref.shape)   # lane-dense block


def _cwd_group_sum(s2, t2, w, tau, tile_rows=None, n_splits=None):
    """sum_r w_r * sum_c softmax(t/tau) * (logsoftmax(t/tau) - logsoftmax(s/tau))
    for one (R, L) row group (rows from stages sharing the same H*W / dtype)."""
    assert s2.shape == t2.shape and w.shape == (s2.shape[0], 1)
    R, L = s2.shape
    itemsize = jnp.dtype(s2.dtype).itemsize
    row_align = max(8, 32 // itemsize)             # sublane granule for this dtype

    # Microscopic groups (< one sublane tile): pad a handful of zero rows.
    # Negligible traffic; zero rows contribute exactly 0.
    if R < row_align:
        pad = row_align - R
        s2 = jnp.pad(s2, ((0, pad), (0, 0)))
        t2 = jnp.pad(t2, ((0, pad), (0, 0)))
        w = jnp.pad(w, ((0, pad), (0, 0)))
        R = R + pad

    vmem_limit, ws_budget, n_tc = _tpu_params()
    ns_req = n_tc if n_splits is None else int(n_splits)

    R_al = -(-R // row_align) * row_align          # row-aligned upper bound

    if tile_rows is None:
        # Working set per row: 2 inputs x 2 pipeline buffers x itemsize plus the
        # ~6 live full-tile f32 temporaries the softmax chain materializes.
        bytes_per_row = L * (4 * itemsize + _F32_TEMP_BYTES_PER_ELEM)
        tr = ws_budget // bytes_per_row
        tr = max(row_align, (tr // row_align) * row_align)
        tr = min(tr, _MAX_TILE_ROWS)
        # Keep >= ~4 pipelined inner steps per core for large R (DMA overlap),
        # but never shrink below 256 rows for it (>=256-row tiles ~ roofline).
        steps_target = max(1, ns_req) * 4
        tr_steps = -(-R // steps_target)
        tr_steps = -(-tr_steps // row_align) * row_align
        if tr_steps < tr:
            tr = max(tr_steps, min(tr, 256))
    else:
        assert tile_rows > 0 and tile_rows % row_align == 0
        tr = tile_rows
    tr = min(tr, R_al)

    tiles = -(-R // tr)
    ns = ns_req if (ns_req > 1 and tiles >= 2) else 1
    inner = -(-tiles // ns)

    # Garbage rows exist when the last tile is ragged or when the core split
    # duplicates (via clamping) the last tile; both handled by in-kernel masking
    # instead of materializing padded copies of the inputs in HBM.
    needs_mask = (tiles * tr != R) or (inner * ns != tiles)

    kernel = functools.partial(_cwd_group_kernel, tau=float(tau), rows_valid=R,
                               inner=inner, needs_mask=needs_mask)

    last = tiles - 1

    def row_map(c, i):
        # Clamp so the block start always lies inside the array; the duplicated
        # tile (when inner*ns > tiles) is fully masked inside the kernel.
        return (jnp.minimum(c * inner + i, last), 0)

    cost = pl.CostEstimate(
        flops=12 * R * L,
        transcendentals=2 * R * L,
        bytes_accessed=2 * R * L * itemsize + R * 4 + ns * 8 * 128 * 4,
    )

    partials = pl.pallas_call(
        kernel,
        out_shape=jax.ShapeDtypeStruct((ns, 8, 128), jnp.float32),
        grid_spec=pltpu.PrefetchScalarGridSpec(
            num_scalar_prefetch=0,
            grid=(ns, inner),
            in_specs=[
                pl.BlockSpec((tr, L), row_map),
                pl.BlockSpec((tr, L), row_map),
                pl.BlockSpec((tr, 1), row_map),
            ],
            out_specs=pl.BlockSpec((1, 8, 128), lambda c, i: (c, 0, 0)),
            scratch_shapes=[pltpu.VMEM((8, L), jnp.float32)],
        ),
        compiler_params=pltpu.CompilerParams(
            # TODO(synk): switch the leading axis to pltpu.CORE_PARALLEL once the
            #             TensorCore-count query is guaranteed exact per chip.
            dimension_semantics=("parallel", "arbitrary"),
            vmem_limit_bytes=vmem_limit,
        ),
        cost_estimate=cost,
    )(s2, t2, w)

    return jnp.sum(partials[:, 0, 0])


def cwd_loss(y_s, y_t, tau=1.0, downcast_to_bf16=False):
    """Total CWD loss over a list of stages (matches CWDLoss.forward).

    Stages sharing the same spatial size H*W (and dtype) are fused into one
    pallas_call; the per-stage 1/(C*N) normalization rides along as a per-row
    weight folded into the kernel's softmax reciprocal, and tau**2 is applied
    once outside.  `downcast_to_bf16` is an opt-in HBM-traffic halving (slightly
    lossy vs. the f32 module semantics).
    """
    assert len(y_s) == len(y_t)
    groups, order = {}, []
    for s, t in zip(y_s, y_t):
        assert s.shape == t.shape
        N, C, H, W = s.shape
        if downcast_to_bf16 and s.dtype != jnp.bfloat16:
            s = s.astype(jnp.bfloat16)
            t = t.astype(jnp.bfloat16)
        L = H * W
        key = (L, jnp.dtype(s.dtype).name)
        if key not in groups:
            groups[key] = []
            order.append(key)
        groups[key].append((s.reshape(N * C, L), t.reshape(N * C, L),
                            1.0 / float(C * N)))

    total = jnp.float32(0.0)
    for key in order:
        items = groups[key]
        if len(items) == 1:
            s2, t2, wv = items[0]
            w = jnp.full((s2.shape[0], 1), wv, jnp.float32)
        else:
            s2 = jnp.concatenate([it[0] for it in items], axis=0)
            t2 = jnp.concatenate([it[1] for it in items], axis=0)
            w = jnp.concatenate(
                [jnp.full((it[0].shape[0], 1), it[2], jnp.float32) for it in items],
                axis=0)
        total = total + _cwd_group_sum(s2, t2, w, tau)
    return total * (float(tau) ** 2)


def _reference_cwd_loss(y_s, y_t, tau=1.0):
    """Pure-JAX reference matching the PyTorch semantics."""
    total = 0.0
    for s, t in zip(y_s, y_t):
        N, C, H, W = s.shape
        s2 = s.reshape(-1, H * W).astype(jnp.float32) / tau
        t2 = t.reshape(-1, H * W).astype(jnp.float32) / tau
        p_t = jax.nn.softmax(t2, axis=1)
        cost = jnp.sum(
            p_t * jax.nn.log_softmax(t2, axis=1)
            - p_t * jax.nn.log_softmax(s2, axis=1)
        ) * (tau ** 2)
        total = total + cost / (C * N)
    return total


if __name__ == "__main__":
    key = jax.random.PRNGKey(0)
    tau = 1.0

    # Stages: includes an R % 8 != 0 case (ragged/masked path) and two stages
    # sharing H*W = 64 (exercises the stage-fusion path).
    shapes = [(2, 4, 16, 16), (2, 8, 8, 16), (1, 3, 8, 8), (2, 16, 8, 8)]
    keys = jax.random.split(key, 2 * len(shapes))
    y_s = [jax.random.normal(keys[2 * i], shp, dtype=jnp.float32)
           for i, shp in enumerate(shapes)]
    y_t = [jax.random.normal(keys[2 * i + 1], shp, dtype=jnp.float32)
           for i, shp in enumerate(shapes)]

    loss = jax.block_until_ready(cwd_loss(y_s, y_t, tau=tau))
    ref = jax.block_until_ready(_reference_cwd_loss(y_s, y_t, tau=tau))
    assert jnp.allclose(loss, ref, rtol=1e-5, atol=1e-5), (loss, ref)

    # tau != 1 path (scaling not skipped at trace time).
    loss2 = jax.block_until_ready(cwd_loss(y_s, y_t, tau=2.0))
    ref2 = jax.block_until_ready(_reference_cwd_loss(y_s, y_t, tau=2.0))
    assert jnp.allclose(loss2, ref2, rtol=1e-5, atol=1e-5), (loss2, ref2)

    # Multi-tile accumulation + forced 2-way core split, even split (no mask).
    N, C, H, W = shapes[3]
    sB = y_s[3].reshape(N * C, H * W)
    tB = y_t[3].reshape(N * C, H * W)
    wB = jnp.full((N * C, 1), 1.0 / (C * N), jnp.float32)
    small = jax.block_until_ready(
        _cwd_group_sum(sB, tB, wB, tau, tile_rows=8, n_splits=2))
    ref3 = jax.block_until_ready(_reference_cwd_loss([y_s[3]], [y_t[3]], tau=tau))
    assert jnp.allclose(small, ref3, rtol=1e-5, atol=1e-5), (small, ref3)

    # Fused group with ragged last tile + clamped duplicate tile (uneven split).
    sA = y_s[2].reshape(3, 64)
    tA = y_t[2].reshape(3, 64)
    s_f = jnp.concatenate([sA, sB], axis=0)           # R = 35
    t_f = jnp.concatenate([tA, tB], axis=0)
    w_f = jnp.concatenate([jnp.full((3, 1), 1.0 / 3.0, jnp.float32), wB], axis=0)
    fused = jax.block_until_ready(
        _cwd_group_sum(s_f, t_f, w_f, tau, tile_rows=16, n_splits=2))
    ref_f = jax.block_until_ready(_reference_cwd_loss(y_s[2:4], y_t[2:4], tau=tau))
    assert jnp.allclose(fused, ref_f, rtol=1e-5, atol=1e-5), (fused, ref_f)

    # bf16 activations at the pallas_call boundary (kernel upcasts to f32).
    y_s_bf = [a.astype(jnp.bfloat16) for a in y_s]
    y_t_bf = [a.astype(jnp.bfloat16) for a in y_t]
    loss_bf = jax.block_until_ready(cwd_loss(y_s_bf, y_t_bf, tau=tau))
    ref_bf = jax.block_until_ready(_reference_cwd_loss(y_s_bf, y_t_bf, tau=tau))
    assert jnp.allclose(loss_bf, ref_bf, rtol=1e-4, atol=1e-4), (loss_bf, ref_bf)

    # Opt-in wrapper-side bf16 downcast (halves HBM traffic).
    loss_dc = jax.block_until_ready(
        cwd_loss(y_s, y_t, tau=tau, downcast_to_bf16=True))
    assert jnp.allclose(loss_dc, ref_bf, rtol=1e-4, atol=1e-4), (loss_dc, ref_bf)

    print("KERNEL_OK")
</pallas_src>

<mosaic_0001>
module attributes {stable_mosaic.version = 11 : i64} {
  func.func @_cwd_group_kernel(%arg0: i32, %arg1: i32, %arg2: memref<8x256xf32, #tpu.memory_space<vmem>>, %arg3: memref<8x256xf32, #tpu.memory_space<vmem>>, %arg4: memref<8x1xf32, #tpu.memory_space<vmem>>, %arg5: memref<1x8x128xf32, #tpu.memory_space<vmem>>, %arg6: memref<8x256xf32, #tpu.memory_space<vmem>>) attributes {dimension_semantics = [#tpu.dimension_semantics<parallel>, #tpu.dimension_semantics<arbitrary>], iteration_bounds = array<i64: 1, 1>, scalar_prefetch = 0 : i64, scratch_operands = 1 : i64, tpu.core_type = #tpu.core_type<tc>, window_params = [{transform_indices = @transform_0, window_bounds = array<i64: 8, 256>}, {transform_indices = @transform_1, window_bounds = array<i64: 8, 256>}, {transform_indices = @transform_2, window_bounds = array<i64: 8, 1>}, {transform_indices = @transform_3, window_bounds = array<i64: 1, 8, 128>}]} {
    %c0_i32 = arith.constant 0 : i32
    %0 = arith.cmpi eq, %arg1, %c0_i32 : i32
    %1 = arith.extui %0 : i1 to i32
    %c0_i32_0 = arith.constant 0 : i32
    %2 = arith.cmpi ne, %1, %c0_i32_0 : i32
    scf.if %2 {
      %cst_16 = arith.constant 0.000000e+00 : f32
      %39 = vector.broadcast %cst_16 : f32 to vector<8x256xf32>
      %c0_17 = arith.constant 0 : index
      %c0_18 = arith.constant 0 : index
      %40 = vector.load %arg6[%c0_17, %c0_18] : memref<8x256xf32, #tpu.memory_space<vmem>>, vector<8x256xf32>
      tpu.vector_store %arg6[%c0_17, %c0_18], %39 {strides = array<i32>} : memref<8x256xf32, #tpu.memory_space<vmem>>, vector<8x256xf32>,
    } else {
    }
    %c0 = arith.constant 0 : index
    %c0_1 = arith.constant 0 : index
    %3 = vector.load %arg2[%c0, %c0_1] : memref<8x256xf32, #tpu.memory_space<vmem>>, vector<8x256xf32>
    %c0_2 = arith.constant 0 : index
    %c0_3 = arith.constant 0 : index
    %4 = vector.load %arg3[%c0_2, %c0_3] : memref<8x256xf32, #tpu.memory_space<vmem>>, vector<8x256xf32>
    %c0_4 = arith.constant 0 : index
    %c0_5 = arith.constant 0 : index
    %5 = vector.load %arg4[%c0_4, %c0_5] : memref<8x1xf32, #tpu.memory_space<vmem>>, vector<8x1xf32>
    %cst = arith.constant dense<0xFF800000> : vector<8xf32>
    %6 = vector.multi_reduction <maximumf>, %4, %cst [1] : vector<8x256xf32> to vector<8xf32>
    %7 = vector.shape_cast %6 : vector<8xf32> to vector<8x1xf32>
    %8 = vector.broadcast %7 : vector<8x1xf32> to vector<8x256xf32>
    %9 = arith.subf %4, %8 : vector<8x256xf32>
    %10 = math.exp %9 : vector<8x256xf32>
    %cst_6 = arith.constant dense<0.000000e+00> : vector<8xf32>
    %11 = vector.multi_reduction <add>, %10, %cst_6 [1] : vector<8x256xf32> to vector<8xf32>
    %12 = vector.shape_cast %11 : vector<8xf32> to vector<8x1xf32>
    %cst_7 = arith.constant dense<0xFF800000> : vector<8xf32>
    %13 = vector.multi_reduction <maximumf>, %3, %cst_7 [1] : vector<8x256xf32> to vector<8xf32>
    %14 = vector.shape_cast %13 : vector<8xf32> to vector<8x1xf32>
    %15 = vector.broadcast %14 : vector<8x1xf32> to vector<8x256xf32>
    %16 = arith.subf %3, %15 : vector<8x256xf32>
    %17 = math.exp %16 : vector<8x256xf32>
    %cst_8 = arith.constant dense<0.000000e+00> : vector<8xf32>
    %18 = vector.multi_reduction <add>, %17, %cst_8 [1] : vector<8x256xf32> to vector<8xf32>
    %19 = vector.shape_cast %18 : vector<8xf32> to vector<8x1xf32>
    %20 = math.log %12 : vector<8x1xf32>
    %21 = math.log %19 : vector<8x1xf32>
    %22 = arith.subf %20, %21 : vector<8x1xf32>
    %23 = tpu.reciprocal %12 : vector<8x1xf32> -> vector<8x1xf32>
    %24 = arith.mulf %5, %23 : vector<8x1xf32>
    %25 = vector.broadcast %24 : vector<8x1xf32> to vector<8x256xf32>
    %26 = arith.mulf %10, %25 : vector<8x256xf32>
    %27 = arith.subf %9, %16 : vector<8x256xf32>
    %28 = vector.broadcast %22 : vector<8x1xf32> to vector<8x256xf32>
    %29 = arith.subf %27, %28 : vector<8x256xf32>
    %30 = arith.mulf %26, %29 : vector<8x256xf32>
    %c0_9 = arith.constant 0 : index
    %c0_10 = arith.constant 0 : index
    %31 = vector.load %arg6[%c0_9, %c0_10] : memref<8x256xf32, #tpu.memory_space<vmem>>, vector<8x256xf32>
    %32 = vector.shape_cast %30 : vector<8x256xf32> to vector<1x8x256xf32>
    %cst_11 = arith.constant dense<0.000000e+00> : vector<8x256xf32>
    %33 = vector.multi_reduction <add>, %32, %cst_11 [0] : vector<1x8x256xf32> to vector<8x256xf32>
    %34 = arith.addf %31, %33 : vector<8x256xf32>
    %c0_12 = arith.constant 0 : index
    %c0_13 = arith.constant 0 : index
    %35 = vector.load %arg6[%c0_12, %c0_13] : memref<8x256xf32, #tpu.memory_space<vmem>>, vector<8x256xf32>
    tpu.vector_store %arg6[%c0_12, %c0_13], %34 {strides = array<i32>} : memref<8x256xf32, #tpu.memory_space<vmem>>, vector<8x256xf32>,
    %c0_i32_14 = arith.constant 0 : i32
    %36 = arith.cmpi eq, %arg1, %c0_i32_14 : i32
    %37 = arith.extui %36 : i1 to i32
    %c0_i32_15 = arith.constant 0 : i32
    %38 = arith.cmpi ne, %37, %c0_i32_15 : i32
    scf.if %38 {
      %c0_16 = arith.constant 0 : index
      %c0_17 = arith.constant 0 : index
      %39 = vector.load %arg6[%c0_16, %c0_17] : memref<8x256xf32, #tpu.memory_space<vmem>>, vector<8x256xf32>
      %40 = vector.shape_cast %39 : vector<8x256xf32> to vector<1x8x256xf32>
      %cst_18 = arith.constant dense<0.000000e+00> : vector<1xf32>
      %41 = vector.multi_reduction <add>, %40, %cst_18 [1, 2] : vector<1x8x256xf32> to vector<1xf32>
      %42 = vector.shape_cast %41 : vector<1xf32> to vector<1x1x1xf32>
      %43 = vector.extract %42[0, 0, 0] : f32 from vector<1x1x1xf32>
      %44 = vector.broadcast %43 : f32 to vector<1x8x128xf32>
      %c0_19 = arith.constant 0 : index
      %c0_20 = arith.constant 0 : index
      %c0_21 = arith.constant 0 : index
      %45 = vector.load %arg5[%c0_19, %c0_20, %c0_21] : memref<1x8x128xf32, #tpu.memory_space<vmem>>, vector<1x8x128xf32>
      tpu.vector_store %arg5[%c0_19, %c0_20, %c0_21], %44 {strides = array<i32>} : memref<1x8x128xf32, #tpu.memory_space<vmem>>, vector<1x8x128xf32>,
    } else {
    }
    return
  }
  func.func @transform_0(%arg0: i32, %arg1: i32) -> (i32, i32) {
    %c1_i32 = arith.constant 1 : i32
    %0 = arith.muli %arg0, %c1_i32 : i32
    %1 = arith.addi %0, %arg1 : i32
    %c0_i32 = arith.constant 0 : i32
    %2 = arith.minsi %1, %c0_i32 : i32
    %c0_i32_0 = arith.constant 0 : i32
    %c0_i32_1 = arith.constant 0 : i32
    return %2, %c0_i32_0 : i32, i32
  }
  func.func @transform_1(%arg0: i32, %arg1: i32) -> (i32, i32) {
    %c1_i32 = arith.constant 1 : i32
    %0 = arith.muli %arg0, %c1_i32 : i32
    %1 = arith.addi %0, %arg1 : i32
    %c0_i32 = arith.constant 0 : i32
    %2 = arith.minsi %1, %c0_i32 : i32
    %c0_i32_0 = arith.constant 0 : i32
    %c0_i32_1 = arith.constant 0 : i32
    return %2, %c0_i32_0 : i32, i32
  }
  func.func @transform_2(%arg0: i32, %arg1: i32) -> (i32, i32) {
    %c1_i32 = arith.constant 1 : i32
    %0 = arith.muli %arg0, %c1_i32 : i32
    %1 = arith.addi %0, %arg1 : i32
    %c0_i32 = arith.constant 0 : i32
    %2 = arith.minsi %1, %c0_i32 : i32
    %c0_i32_0 = arith.constant 0 : i32
    %c0_i32_1 = arith.constant 0 : i32
    return %2, %c0_i32_0 : i32, i32
  }
  func.func @transform_3(%arg0: i32, %arg1: i32) -> (i32, i32, i32) {
    %c0_i32 = arith.constant 0 : i32
    %c0_i32_0 = arith.constant 0 : i32
    %c0_i32_1 = arith.constant 0 : i32
    return %arg0, %c0_i32, %c0_i32_0 : i32, i32, i32
  }
}

</mosaic_0001>

<llo_original>
// kernel: tpu_custom_call.1
$region0: #{tpu_custom_call.1}
  #allocation0 [shape = 'u32[]', space=smem, size = 0x4, offset = 0x4, fixed_abs, tag = 'smem constant byte address 0x4 - core index']
  #allocation1 [shape = 'u32[144,128]{1,0:T(1,128)}', space=vmem, size = 0x12000, scoped, tag = 'internal scratch']
  #allocation2 [shape = 'f32[8,256]{1,0:T(8,128)}', space=vmem, size = 0x2000, scoped, tag = 'scratch operand']
  %s0 = inlined_call_operand.hbm [shape: f32[8,256], index: 0, kind: input, shape index: {}]
  %s1 = inlined_call_operand.hbm [shape: f32[8,256], index: 1, kind: input, shape index: {}]
  %s2 = inlined_call_operand.vmem [shape: f32[8,1], index: 2, kind: input, shape index: {}]
  %s3 = inlined_call_operand.hbm [shape: f32[1,8,128], index: 3, kind: output, shape index: {}]
  %s4 = sld [smem:[#allocation0]]
  $region38: #{tpu_custom_call.1} parent=0
    _
  %s6 = ssub.s32 1, %s4
  %s7 = scalar_select 0, %s6, %s4
  $region1: #{tpu_custom_call.1} parent=0
    #allocation3 [shape = 'u8[8192]{0}', space=vmem, size = 0x2000, scoped, tag = 'input window, operand 0, single buffered']
    #allocation4 [shape = 's32[1]{0}', space=sflag, size = 0x4, scoped, tag = 'scoped memory for tpu_custom_call.1']
    #allocation5 [shape = 's32[1]{0}', space=sflag, size = 0x4, scoped, tag = 'scoped memory for tpu_custom_call.1']
    #allocation6 [shape = 'u8[8192]{0}', space=vmem, size = 0x2000, scoped, tag = 'input window, operand 1, single buffered']
    #allocation7 [shape = 's32[1]{0}', space=sflag, size = 0x4, scoped, tag = 'scoped memory for tpu_custom_call.1']
    #allocation8 [shape = 'u8[4096]{0}', space=vmem, size = 0x1000, scoped, tag = 'output window, operand 0, single buffered']
    %8 = vsyncpa [#allocation4], 0
    %9 = vsyncpa [#allocation7], 0
    %10 = vsyncpa [#allocation5], 0
    // Predicated region
    $region2: #{tpu_custom_call.1} parent=1 // pred_check
      _
    $region3: #{tpu_custom_call.1} parent=1 // pred_check_branch
      %12 = sbr.rel (0) target = $region5
    $region4: #{tpu_custom_call.1} parent=1 // pred_region
      %s13 = sadd.s32 0, 0
      %p14 = scmp.lt.s32.totalorder %s13, 0
      %s15 = scalar_select %p14, %s13, 0
      %s17 = ssub.s32 256, 256
      %18 = vsyncadd [#allocation4], %s17
      %s19 = smul.addr %s15, 2
      %s20 = smul.addr %s19, 128
      %s21 = scalar_lea.hbm %s0, %s20
      %s23 = sshll.u32 [#allocation3], 4
      %s24 = int_to_ptr.vmem [resolvable:$true] %s23
      %26 = dma.hbm_to_vmem [thread:$0]  %s21, 256, %s24, [#allocation4]
    $region5: #{tpu_custom_call.1} parent=1 // pred_fallthru
      _
    // Predicated region
    $region6: #{tpu_custom_call.1} parent=1 // pred_check
      _
    $region7: #{tpu_custom_call.1} parent=1 // pred_check_branch
      %28 = sbr.rel (0) target = $region9
    $region8: #{tpu_custom_call.1} parent=1 // pred_region
      %s29 = sadd.s32 0, 0
      %p30 = scmp.lt.s32.totalorder %s29, 0
      %s31 = scalar_select %p30, %s29, 0
      %s33 = ssub.s32 256, 256
      %34 = vsyncadd [#allocation7], %s33
      %s35 = smul.addr %s31, 2
      %s36 = smul.addr %s35, 128
      %s37 = scalar_lea.hbm %s1, %s36
      %s39 = sshll.u32 [#allocation6], 4
      %s40 = int_to_ptr.vmem [resolvable:$true] %s39
      %42 = dma.hbm_to_vmem [thread:$0]  %s37, 256, %s40, [#allocation7]
    $region9: #{tpu_custom_call.1} parent=1 // pred_fallthru
      _
    // Predicated region
    $region10: #{tpu_custom_call.1} parent=1 // pred_check
      _
    $region11: #{tpu_custom_call.1} parent=1 // pred_check_branch
      %44 = sbr.rel (0) target = $region13
    $region12: #{tpu_custom_call.1} parent=1 // pred_region
      %s45 = sadd.s32 0, 0
      %p46 = scmp.lt.s32.totalorder %s45, 0
      %s47 = scalar_select %p46, %s45, 0
      %p48 = scmp.lt.s32.totalorder %s47, 0
      %s49 = scalar_select %p48, %s47, 0
      %s50 = smul.addr %s49, 8
      %s51 = scalar_lea.vmem %s2, %s50
      %s52 = sadd.s32 0, 0
      %p53 = scmp.lt.s32.totalorder %s52, 0
      %s54 = scalar_select %p53, %s52, 0
    $region13: #{tpu_custom_call.1} parent=1 // pred_fallthru
      _
    // Predicated region
    $region14: #{tpu_custom_call.1} parent=1 // pred_check
      _
    $region15: #{tpu_custom_call.1} parent=1 // pred_check_branch
      %56 = sbr.rel (0) target = $region17
    $region16: #{tpu_custom_call.1} parent=1 // pred_region
      %57 = dma.done [#allocation4], 256
    $region17: #{tpu_custom_call.1} parent=1 // pred_fallthru
      _
    // Predicated region
    $region18: #{tpu_custom_call.1} parent=1 // pred_check
      _
    $region19: #{tpu_custom_call.1} parent=1 // pred_check_branch
      %59 = sbr.rel (0) target = $region21
    $region20: #{tpu_custom_call.1} parent=1 // pred_region
      %60 = dma.done [#allocation7], 256
    $region21: #{tpu_custom_call.1} parent=1 // pred_fallthru
      _
    %s61 = sadd.s32 0, 0
    %p62 = scmp.lt.s32.totalorder %s61, 0
    %s63 = scalar_select %p62, %s61, 0
    %p64 = scmp.lt.s32.totalorder %s63, 0
    %s65 = scalar_select %p64, %s63, 0
    %s66 = smul.addr %s65, 8
    %s67 = scalar_lea.vmem %s2, %s66
    %s68 = sadd.s32 0, 0
    %p69 = scmp.lt.s32.totalorder %s68, 0
    %s70 = scalar_select %p69, %s68, 0
    %s71 = sadd.s32 0, 0
    %p72 = scmp.lt.s32.totalorder %s71, 0
    %s73 = scalar_select %p72, %s71, 0
    %s74 = sadd.s32 0, 0
    %p75 = scmp.lt.s32.totalorder %s74, 0
    %s76 = scalar_select %p75, %s74, 0
    %p77 = scmp.lt.s32.totalorder %s76, 0
    %s78 = scalar_select %p77, %s76, 0
    %s79 = smul.addr %s78, 8
    %s80 = scalar_lea.vmem %s2, %s79
    %s81 = sadd.s32 0, 0
    %p82 = scmp.lt.s32.totalorder %s81, 0
    %s83 = scalar_select %p82, %s81, 0
    %p84 = scmp.eq.s32.totalorder 0, 0
    // Predicated region
    $region22: #{tpu_custom_call.1} parent=1 // pred_check
      %p85 = pneg %p84
    $region23: #{tpu_custom_call.1} parent=1 // pred_check_branch
      %87 = sbr.rel (%p85) target = $region25
    $region24: #{tpu_custom_call.1} parent=1 // pred_region
      %88 = vst [vmem:[#allocation2] sm:$0xff] 0.0
      %89 = vst [vmem:[#allocation2 + $0x8] sm:$0xff] 0.0
    $region25: #{tpu_custom_call.1} parent=1 // pred_fallthru
      _
    %v90 = vld [vmem:[#allocation3] sm:$0xff]
    %v91 = vld [vmem:[#allocation3 + $0x8] sm:$0xff]
    %v92 = vld [vmem:[#allocation6] sm:$0xff]
    %v93 = vld [vmem:[#allocation6 + $0x8] sm:$0xff]
    %v94 = vld [vmem:[%s80] sm:$0xff]
    %v95 = vmax.f32 %v92, %v93
    %96 = vmax.xlane.f32.xlu0 %v95
    %v97 = vpop.xlane.xlu0 %96
    %v98 = vsub.f32 %v92, %v97
    %v99 = vsub.f32 %v93, %v97
    %v100 = vmul.f32 %v98, 1.442695
    %v101 = vpow.pop %v100
    %v102 = vmul.f32 %v99, 1.442695
    %v103 = vpow.pop %v102
    %v104 = vadd.f32 %v101, %v103
    %105 = vadd.xlane.f32.xlu0 %v104
    %v106 = vpop.xlane.xlu0 %105
    %v107 = vmax.f32 %v90, %v91
    %108 = vmax.xlane.f32.xlu0 %v107
    %v109 = vpop.xlane.xlu0 %108
    %v110 = vsub.f32 %v90, %v109
    %v111 = vsub.f32 %v91, %v109
    %v112 = vmul.f32 %v110, 1.442695
    %v113 = vpow.pop %v112
    %v114 = vmul.f32 %v111, 1.442695
    %v115 = vpow.pop %v114
    %v116 = vadd.f32 %v113, %v115
    %117 = vadd.xlane.f32.xlu0 %v116
    %v118 = vpop.xlane.xlu0 %117
    %v119 = vlog2.pop %v106
    %v120 = vmul.f32 %v119, 0.6931472
    %v121 = vlog2.pop %v118
    %v122 = vmul.f32 %v121, 0.6931472
    %v123 = vsub.f32 %v120, %v122
    %v124 = vrcp.pop %v106
    %v125 = vmul.f32 %v94, %v124
    %127 = vset.pattern.permute.xlu0 0
    %128 = vperm.xlu0 %127, %v125
    %v129 = vpop.permute.xlu0 %128
    %v131 = vmul.f32 %v101, %v129
    %v132 = vmul.f32 %v103, %v129
    %v133 = vsub.f32 %v98, %v110
    %v134 = vsub.f32 %v99, %v111
    %v135 = vsub.f32 %v133, %v123
    %v136 = vsub.f32 %v134, %v123
    %v137 = vmul.f32 %v131, %v135
    %v138 = vmul.f32 %v132, %v136
    %v139 = vld [vmem:[#allocation2] sm:$0xff]
    %v140 = vld [vmem:[#allocation2 + $0x8] sm:$0xff]
    %v141 = vadd.f32 %v137, 0.0
    %v142 = vadd.f32 %v138, 0.0
    %v143 = vadd.f32 %v139, %v141
    %v144 = vadd.f32 %v140, %v142
    %145 = vst [vmem:[#allocation2] sm:$0xff] %v143
    %146 = vst [vmem:[#allocation2 + $0x8] sm:$0xff] %v144
    // Predicated region
    $region26: #{tpu_custom_call.1} parent=1 // pred_check
      %p147 = pneg %p84
    $region27: #{tpu_custom_call.1} parent=1 // pred_check_branch
      %149 = sbr.rel (%p147) target = $region29
    $region28: #{tpu_custom_call.1} parent=1 // pred_region
      %v150 = vld [vmem:[#allocation2] sm:$0xff]
      %v151 = vld [vmem:[#allocation2 + $0x8] sm:$0xff]
      %v152 = vadd.f32 %v150, %v151
      %153 = vadd.xlane.f32.xlu0 %v152
      %v154 = vpop.xlane.xlu0 %153
      %v155 = vrot.slane %v154, 4
      %v156 = vadd.f32 %v154, %v155
      %v157 = vrot.slane %v156, 2
      %v158 = vadd.f32 %v156, %v157
      %v159 = vrot.slane %v158, 1
      %v160 = vadd.f32 %v158, %v159
      %s161 = vtos %v160
      %v162 = vstv %s161
      %163 = vst [vmem:[#allocation8] sm:$0xff] %v162
    $region29: #{tpu_custom_call.1} parent=1 // pred_fallthru
      _
    // Predicated region
    $region30: #{tpu_custom_call.1} parent=1 // pred_check
      _
    $region31: #{tpu_custom_call.1} parent=1 // pred_check_branch
      %165 = sbr.rel (0) target = $region33
    $region32: #{tpu_custom_call.1} parent=1 // pred_region
      %s167 = ssub.s32 128, 128
      %168 = vsyncadd [#allocation5], %s167
      %s170 = sshll.u32 [#allocation8], 4
      %s171 = int_to_ptr.vmem [resolvable:$true] %s170
      %173 = dma.vmem_to_hbm [thread:$0]  %s171, 128, %s3, [#allocation5]
    $region33: #{tpu_custom_call.1} parent=1 // pred_fallthru
      _
    // Predicated region
    $region34: #{tpu_custom_call.1} parent=1 // pred_check
      _
    $region35: #{tpu_custom_call.1} parent=1 // pred_check_branch
      %175 = sbr.rel (0) target = $region37
    $region36: #{tpu_custom_call.1} parent=1 // pred_region
      %176 = dma.done [#allocation5], 128
    $region37: #{tpu_custom_call.1} parent=1 // pred_fallthru
      _
    %177 = vsyncpa [#allocation4], 1
    %178 = vsyncpa [#allocation7], 1
    %179 = vsyncpa [#allocation5], 1

</llo_original>
